<compile_context>
chip_gen: v7x
topology: tpu7x:2x2x1
jax: 0.10.0
libtpu: 0.0.40
codegen_flags: <defaults>
</compile_context>

<pallas_src>
import numpy as np
import jax
import jax.numpy as jnp
from jax.experimental import pallas as pl
from jax.experimental.pallas import tpu as pltpu

VOCAB_SZ = 30522   # len(DistilBertTokenizer('distilbert-base-uncased').vocab)
EMB_DIM = 10       # chosen so pool(30) * emb_dim == 300 == l_out.in_features
POOL_OUT = 30


def _adaptive_avg_pool_matrix(length, out_size):
    """(length, out_size) matrix replicating torch.nn.AdaptiveAvgPool1d."""
    p = np.zeros((length, out_size), np.float32)
    for i in range(out_size):
        s = (i * length) // out_size
        e = ((i + 1) * length + out_size - 1) // out_size  # ceil
        p[s:e, i] = 1.0 / (e - s)
    return jnp.asarray(p)


def base_conv_forward(x_ids, emb_table, w_conv, b_conv, w_lin, b_lin):
    bs, sl = x_ids.shape
    C = emb_table.shape[1]
    BL = bs * sl

    # ---- glue (plain JAX) --------------------------------------------------
    # TODO(synk): embedding gather over the 30522-row table stays in plain JAX
    # (data-dependent HBM gather; a manual-DMA Pallas gather isn't worth it here).
    e = emb_table[x_ids]                               # (bs, sl, C)
    x = e.reshape(bs, C, sl)                           # exact torch .view semantics
    x_packed = jnp.transpose(x, (1, 0, 2)).reshape(C, BL)   # lane-pack the batch

    # Conv weight fused over the 3 taps: wf[o, k*C + i] = w_conv[o, i, k]
    wf = jnp.transpose(w_conv, (0, 2, 1)).reshape(C, 3 * C)
    bc = b_conv.reshape(C, 1)

    # AdaptiveAvgPool1d(30) and Linear(300,1) are both linear maps after the
    # ReLU, so fold them into a single (C, sl) weight, tiled across the batch.
    pool_m = _adaptive_avg_pool_matrix(sl, POOL_OUT)   # (sl, 30)
    fused_w = w_lin.reshape(C, POOL_OUT) @ pool_m.T    # (C, sl)
    fw_tiled = jnp.tile(fused_w, (1, bs))              # (C, BL)

    # Per-sample lane-segment sum expressed as a tiny matmul with a 0/1 selector.
    sel = jnp.repeat(jnp.eye(bs, dtype=jnp.float32), sl, axis=0)   # (BL, bs)
    bl = b_lin.reshape(1, 1)

    def kernel(x_ref, wf_ref, bc_ref, fw_ref, sel_ref, bl_ref, out_ref):
        xb = x_ref[...]                                # (C, BL) f32
        # Position of each lane inside its own sample: used to mask the +-1
        # conv shifts so they don't leak across sample boundaries.
        pos = jax.lax.broadcasted_iota(jnp.int32, xb.shape, 1) % sl
        zeros = jnp.zeros_like(xb)
        x_left = jnp.where(pos == 0, zeros,
                           pltpu.roll(xb, shift=1, axis=1))        # x[l-1]
        x_right = jnp.where(pos == sl - 1, zeros,
                            pltpu.roll(xb, shift=BL - 1, axis=1))  # x[l+1]

        # Fuse the 3 conv taps into one K=3C matmul: [x_left; x; x_right].
        stacked = jnp.concatenate([x_left, xb, x_right], axis=0)   # (3C, BL)
        conv = jnp.dot(wf_ref[...], stacked,
                       preferred_element_type=jnp.float32) + bc_ref[...]
        act = jnp.maximum(conv, 0.0)                   # ReLU

        # Fused pool+linear: elementwise weight, then per-sample segment sum.
        prod = act * fw_ref[...]                                        # (C, BL)
        per_sample = jnp.dot(prod, sel_ref[...],
                             preferred_element_type=jnp.float32)        # (C, bs)
        logits = jnp.sum(per_sample, axis=0, keepdims=True) + bl_ref[...]  # (1, bs)
        out_ref[...] = jax.nn.sigmoid(logits)

    out = pl.pallas_call(
        kernel,
        out_shape=jax.ShapeDtypeStruct((1, bs), jnp.float32),
        # Whole batch resident in ONE grid step (bs*sl*C*4B ~ 5 KiB).  For a
        # large bs, block the batch so B_blk*sl lanes stays a multiple of 128
        # and the double-buffered tile fits VMEM (64 MiB on v7x).
        grid=(1,),
        in_specs=[
            pl.BlockSpec((C, BL), lambda i: (0, 0)),        # lane-packed batch
            pl.BlockSpec((C, 3 * C), lambda i: (0, 0)),     # fused conv weight
            pl.BlockSpec((C, 1), lambda i: (0, 0)),         # conv bias
            pl.BlockSpec((C, BL), lambda i: (0, 0)),        # fused pool+linear weight
            pl.BlockSpec((BL, bs), lambda i: (0, 0)),       # per-sample selector
            pl.BlockSpec((1, 1), lambda i: (0, 0)),         # linear bias
        ],
        out_specs=pl.BlockSpec((1, bs), lambda i: (0, 0)),  # per-step output block
        compiler_params=pltpu.CompilerParams(
            # Per-step output block => batch axis can be 'parallel' (v7x megacore
            # ready if the batch is ever blocked over >1 grid step).
            dimension_semantics=("parallel",)),
    )(x_packed, wf, bc, fw_tiled, sel, bl)

    return out.reshape(bs, 1)


if __name__ == "__main__":
    key = jax.random.PRNGKey(0)
    k_ids, k_emb, k_wc, k_bc, k_wl, k_bl = jax.random.split(key, 6)
    bs, sl = 2, 60

    x_ids = jax.random.randint(k_ids, (bs, sl), 0, VOCAB_SZ, dtype=jnp.int32)
    emb_table = jax.random.normal(k_emb, (VOCAB_SZ, EMB_DIM), jnp.float32)
    w_conv = jax.random.normal(k_wc, (EMB_DIM, EMB_DIM, 3), jnp.float32) * 0.2
    b_conv = jax.random.normal(k_bc, (EMB_DIM,), jnp.float32) * 0.1
    w_lin = jax.random.normal(k_wl, (1, EMB_DIM * POOL_OUT), jnp.float32) * 0.05
    b_lin = jax.random.normal(k_bl, (1,), jnp.float32) * 0.05

    out = jax.block_until_ready(
        base_conv_forward(x_ids, emb_table, w_conv, b_conv, w_lin, b_lin))

    # Independent plain-JAX reference (conv_general_dilated + reshape-mean pool;
    # reshape-mean == AdaptiveAvgPool1d(30) exactly because sl % 30 == 0).
    e_ref = emb_table[x_ids].reshape(bs, EMB_DIM, sl)
    conv_ref = jax.lax.conv_general_dilated(
        e_ref, w_conv, window_strides=(1,), padding=[(1, 1)],
        dimension_numbers=("NCH", "OIH", "NCH"))
    act_ref = jnp.maximum(conv_ref + b_conv[None, :, None], 0.0)
    pooled_ref = act_ref.reshape(bs, EMB_DIM, POOL_OUT, sl // POOL_OUT).mean(-1)
    ref = jax.nn.sigmoid(pooled_ref.reshape(bs, -1) @ w_lin.T + b_lin)

    assert out.shape == (bs, 1) and out.dtype == jnp.float32
    np.testing.assert_allclose(np.asarray(out), np.asarray(ref), rtol=1e-2, atol=1e-2)
    print("KERNEL_OK")
</pallas_src>

<mosaic_0001>
module attributes {stable_mosaic.version = 11 : i64} {
  func.func @kernel(%arg0: i32, %arg1: memref<10x120xf32, #tpu.memory_space<vmem>>, %arg2: memref<10x30xf32, #tpu.memory_space<vmem>>, %arg3: memref<10x1xf32, #tpu.memory_space<vmem>>, %arg4: memref<10x120xf32, #tpu.memory_space<vmem>>, %arg5: memref<120x2xf32, #tpu.memory_space<vmem>>, %arg6: memref<1x1xf32, #tpu.memory_space<vmem>>, %arg7: memref<1x2xf32, #tpu.memory_space<vmem>>) attributes {dimension_semantics = [#tpu.dimension_semantics<parallel>], iteration_bounds = array<i64: 1>, scalar_prefetch = 0 : i64, scratch_operands = 0 : i64, tpu.core_type = #tpu.core_type<tc>, window_params = [{pipeline_mode = #tpu.pipeline_mode<synchronous>, transform_indices = @transform_0, window_bounds = array<i64: 10, 120>}, {pipeline_mode = #tpu.pipeline_mode<synchronous>, transform_indices = @transform_1, window_bounds = array<i64: 10, 30>}, {pipeline_mode = #tpu.pipeline_mode<synchronous>, transform_indices = @transform_2, window_bounds = array<i64: 10, 1>}, {pipeline_mode = #tpu.pipeline_mode<synchronous>, transform_indices = @transform_3, window_bounds = array<i64: 10, 120>}, {pipeline_mode = #tpu.pipeline_mode<synchronous>, transform_indices = @transform_4, window_bounds = array<i64: 120, 2>}, {pipeline_mode = #tpu.pipeline_mode<synchronous>, transform_indices = @transform_5, window_bounds = array<i64: 1, 1>}, {pipeline_mode = #tpu.pipeline_mode<synchronous>, transform_indices = @transform_6, window_bounds = array<i64: 1, 2>}]} {
    %c0 = arith.constant 0 : index
    %c0_0 = arith.constant 0 : index
    %0 = vector.load %arg1[%c0, %c0_0] : memref<10x120xf32, #tpu.memory_space<vmem>>, vector<10x120xf32>
    %1 = tpu.iota {dimensions = array<i32: 1>} : vector<10x120xi32>
    %c60_i32 = arith.constant 60 : i32
    %c0_i32 = arith.constant 0 : i32
    %2 = arith.cmpi eq, %c60_i32, %c0_i32 : i32
    %c1_i32 = arith.constant 1 : i32
    %3 = arith.select %2, %c1_i32, %c60_i32 : i32
    %4 = vector.broadcast %3 : i32 to vector<10x120xi32>
    %5 = arith.remsi %1, %4 : vector<10x120xi32>
    %c0_i32_1 = arith.constant 0 : i32
    %6 = vector.broadcast %c0_i32_1 : i32 to vector<10x120xi32>
    %7 = arith.cmpi ne, %5, %6 : vector<10x120xi32>
    %c0_i32_2 = arith.constant 0 : i32
    %8 = vector.broadcast %c0_i32_2 : i32 to vector<10x120xi32>
    %9 = arith.cmpi slt, %5, %8 : vector<10x120xi32>
    %c0_i32_3 = arith.constant 0 : i32
    %10 = arith.cmpi slt, %3, %c0_i32_3 : i32
    %11 = vector.broadcast %10 : i1 to vector<10x120xi1>
    %12 = vector.broadcast %11 : vector<10x120xi1> to vector<10x120xi1>
    %13 = arith.xori %9, %12 : vector<10x120xi1>
    %14 = arith.andi %13, %7 : vector<10x120xi1>
    %15 = vector.broadcast %3 : i32 to vector<10x120xi32>
    %16 = arith.addi %5, %15 : vector<10x120xi32>
    %17 = arith.select %14, %16, %5 : vector<10x120xi1>, vector<10x120xi32>
    %cst = arith.constant 0.000000e+00 : f32
    %18 = vector.broadcast %cst : f32 to vector<10x120xf32>
    %c0_i32_4 = arith.constant 0 : i32
    %19 = vector.broadcast %c0_i32_4 : i32 to vector<10x120xi32>
    %20 = arith.cmpi eq, %17, %19 : vector<10x120xi32>
    %c1_i32_5 = arith.constant 1 : i32
    %21 = tpu.dynamic_rotate %0 by %c1_i32_5 dim 1 : vector<10x120xf32>, i32 -> vector<10x120xf32>
    %22 = arith.select %20, %18, %21 : vector<10x120xi1>, vector<10x120xf32>
    %c59_i32 = arith.constant 59 : i32
    %23 = vector.broadcast %c59_i32 : i32 to vector<10x120xi32>
    %24 = arith.cmpi eq, %17, %23 : vector<10x120xi32>
    %c119_i32 = arith.constant 119 : i32
    %25 = tpu.dynamic_rotate %0 by %c119_i32 dim 1 : vector<10x120xf32>, i32 -> vector<10x120xf32>
    %26 = arith.select %24, %18, %25 : vector<10x120xi1>, vector<10x120xf32>
    %27 = tpu.concatenate %22, %0, %26 in 0 : vector<10x120xf32>, vector<10x120xf32>, vector<10x120xf32> -> vector<30x120xf32>
    %c0_6 = arith.constant 0 : index
    %c0_7 = arith.constant 0 : index
    %28 = vector.load %arg2[%c0_6, %c0_7] : memref<10x30xf32, #tpu.memory_space<vmem>>, vector<10x30xf32>
    %cst_8 = arith.constant dense<0.000000e+00> : vector<10x120xf32>
    %29 = tpu.matmul %28, %27, %cst_8 {dimension_numbers = #tpu.dot_dimension_numbers<[1], [0], [0], [1], [0, 0, 1, 1], [], []>} : vector<10x30xf32>, vector<30x120xf32>, vector<10x120xf32> -> vector<10x120xf32>
    %c0_9 = arith.constant 0 : index
    %c0_10 = arith.constant 0 : index
    %30 = vector.load %arg3[%c0_9, %c0_10] : memref<10x1xf32, #tpu.memory_space<vmem>>, vector<10x1xf32>
    %31 = vector.broadcast %30 : vector<10x1xf32> to vector<10x120xf32>
    %32 = arith.addf %29, %31 : vector<10x120xf32>
    %cst_11 = arith.constant 0.000000e+00 : f32
    %33 = vector.broadcast %cst_11 : f32 to vector<10x120xf32>
    %34 = arith.maximumf %32, %33 : vector<10x120xf32>
    %c0_12 = arith.constant 0 : index
    %c0_13 = arith.constant 0 : index
    %35 = vector.load %arg4[%c0_12, %c0_13] : memref<10x120xf32, #tpu.memory_space<vmem>>, vector<10x120xf32>
    %36 = arith.mulf %34, %35 : vector<10x120xf32>
    %c0_14 = arith.constant 0 : index
    %c0_15 = arith.constant 0 : index
    %37 = vector.load %arg5[%c0_14, %c0_15] : memref<120x2xf32, #tpu.memory_space<vmem>>, vector<120x2xf32>
    %cst_16 = arith.constant dense<0.000000e+00> : vector<10x2xf32>
    %38 = tpu.matmul %36, %37, %cst_16 {dimension_numbers = #tpu.dot_dimension_numbers<[1], [0], [0], [1], [0, 0, 1, 1], [], []>} : vector<10x120xf32>, vector<120x2xf32>, vector<10x2xf32> -> vector<10x2xf32>
    %cst_17 = arith.constant dense<0.000000e+00> : vector<2xf32>
    %39 = vector.multi_reduction <add>, %38, %cst_17 [0] : vector<10x2xf32> to vector<2xf32>
    %40 = vector.shape_cast %39 : vector<2xf32> to vector<1x2xf32>
    %c0_18 = arith.constant 0 : index
    %c0_19 = arith.constant 0 : index
    %41 = vector.load %arg6[%c0_18, %c0_19] : memref<1x1xf32, #tpu.memory_space<vmem>>, vector<1x1xf32>
    %42 = vector.broadcast %41 : vector<1x1xf32> to vector<1x2xf32>
    %43 = arith.addf %40, %42 : vector<1x2xf32>
    %44 = arith.negf %43 : vector<1x2xf32>
    %45 = math.exp %44 : vector<1x2xf32>
    %cst_20 = arith.constant 1.000000e+00 : f32
    %46 = vector.broadcast %cst_20 : f32 to vector<1x2xf32>
    %47 = arith.addf %46, %45 : vector<1x2xf32>
    %48 = arith.divf %46, %47 : vector<1x2xf32>
    %c0_21 = arith.constant 0 : index
    %c0_22 = arith.constant 0 : index
    %49 = vector.load %arg7[%c0_21, %c0_22] : memref<1x2xf32, #tpu.memory_space<vmem>>, vector<1x2xf32>
    tpu.vector_store %arg7[%c0_21, %c0_22], %48 {strides = array<i32>} : memref<1x2xf32, #tpu.memory_space<vmem>>, vector<1x2xf32>,
    return
  }
  func.func @transform_0(%arg0: i32) -> (i32, i32) {
    %c0_i32 = arith.constant 0 : i32
    %c0_i32_0 = arith.constant 0 : i32
    %c0_i32_1 = arith.constant 0 : i32
    return %c0_i32, %c0_i32_0 : i32, i32
  }
  func.func @transform_1(%arg0: i32) -> (i32, i32) {
    %c0_i32 = arith.constant 0 : i32
    %c0_i32_0 = arith.constant 0 : i32
    %c0_i32_1 = arith.constant 0 : i32
    return %c0_i32, %c0_i32_0 : i32, i32
  }
  func.func @transform_2(%arg0: i32) -> (i32, i32) {
    %c0_i32 = arith.constant 0 : i32
    %c0_i32_0 = arith.constant 0 : i32
    %c0_i32_1 = arith.constant 0 : i32
    return %c0_i32, %c0_i32_0 : i32, i32
  }
  func.func @transform_3(%arg0: i32) -> (i32, i32) {
    %c0_i32 = arith.constant 0 : i32
    %c0_i32_0 = arith.constant 0 : i32
    %c0_i32_1 = arith.constant 0 : i32
    return %c0_i32, %c0_i32_0 : i32, i32
  }
  func.func @transform_4(%arg0: i32) -> (i32, i32) {
    %c0_i32 = arith.constant 0 : i32
    %c0_i32_0 = arith.constant 0 : i32
    %c0_i32_1 = arith.constant 0 : i32
    return %c0_i32, %c0_i32_0 : i32, i32
  }
  func.func @transform_5(%arg0: i32) -> (i32, i32) {
    %c0_i32 = arith.constant 0 : i32
    %c0_i32_0 = arith.constant 0 : i32
    %c0_i32_1 = arith.constant 0 : i32
    return %c0_i32, %c0_i32_0 : i32, i32
  }
  func.func @transform_6(%arg0: i32) -> (i32, i32) {
    %c0_i32 = arith.constant 0 : i32
    %c0_i32_0 = arith.constant 0 : i32
    %c0_i32_1 = arith.constant 0 : i32
    return %c0_i32, %c0_i32_0 : i32, i32
  }
}

</mosaic_0001>

<llo_original>
// kernel: tpu_custom_call.1
$region0: #{tpu_custom_call.1}
  #allocation0 [shape = 'u32[]', space=smem, size = 0x4, offset = 0x4, fixed_abs, tag = 'smem constant byte address 0x4 - core index']
  #allocation1 [shape = 'u32[144,128]{1,0:T(1,128)}', space=vmem, size = 0x12000, scoped, tag = 'internal scratch']
  #allocation2 [shape = 'f32[1,1]{1,0:T(1,128)S(1)}', space=vmem, size = 0x200, scoped, tag = 'scoped memory for tpu_custom_call.1']
  %s0 = inlined_call_operand.vmem [shape: f32[10,120], index: 0, kind: input, shape index: {}]
  %s1 = inlined_call_operand.vmem [shape: f32[10,30], index: 1, kind: input, shape index: {}]
  %s2 = inlined_call_operand.vmem [shape: f32[10,1], index: 2, kind: input, shape index: {}]
  %s3 = inlined_call_operand.vmem [shape: f32[10,120], index: 3, kind: input, shape index: {}]
  %s4 = inlined_call_operand.vmem [shape: f32[120,2], index: 4, kind: input, shape index: {}]
  %s5 = inlined_call_operand.<no memory space> [shape: f32[1,1], index: 5, kind: input, shape index: {}]
  %s6 = inlined_call_operand.hbm [shape: f32[1,2], index: 6, kind: output, shape index: {}]
  %s7 = sld [smem:[#allocation0]]
  $region34: #{tpu_custom_call.1} parent=0
    _
  %s9 = ssub.s32 1, %s7
  %s10 = scalar_select 0, %s9, %s7
  %v11 = vstv %s5
  %12 = vst [vmem:[#allocation2] sm:$0x1] %v11
  $region1: #{tpu_custom_call.1} parent=0
    #allocation3 [shape = 'u8[512]{0}', space=vmem, size = 0x400, scoped, tag = 'output window, operand 0, single buffered']
    #allocation4 [shape = 's32[1]{0}', space=sflag, size = 0x4, scoped, tag = 'scoped memory for tpu_custom_call.1']
    %13 = vsyncpa [#allocation4], 0
    // Predicated region
    $region2: #{tpu_custom_call.1} parent=1 // pred_check
      _
    $region3: #{tpu_custom_call.1} parent=1 // pred_check_branch
      %15 = sbr.rel (0) target = $region5
    $region4: #{tpu_custom_call.1} parent=1 // pred_region
      _
    $region5: #{tpu_custom_call.1} parent=1 // pred_fallthru
      _
    // Predicated region
    $region6: #{tpu_custom_call.1} parent=1 // pred_check
      _
    $region7: #{tpu_custom_call.1} parent=1 // pred_check_branch
      %17 = sbr.rel (0) target = $region9
    $region8: #{tpu_custom_call.1} parent=1 // pred_region
      _
    $region9: #{tpu_custom_call.1} parent=1 // pred_fallthru
      _
    // Predicated region
    $region10: #{tpu_custom_call.1} parent=1 // pred_check
      _
    $region11: #{tpu_custom_call.1} parent=1 // pred_check_branch
      %19 = sbr.rel (0) target = $region13
    $region12: #{tpu_custom_call.1} parent=1 // pred_region
      _
    $region13: #{tpu_custom_call.1} parent=1 // pred_fallthru
      _
    // Predicated region
    $region14: #{tpu_custom_call.1} parent=1 // pred_check
      _
    $region15: #{tpu_custom_call.1} parent=1 // pred_check_branch
      %21 = sbr.rel (0) target = $region17
    $region16: #{tpu_custom_call.1} parent=1 // pred_region
      _
    $region17: #{tpu_custom_call.1} parent=1 // pred_fallthru
      _
    // Predicated region
    $region18: #{tpu_custom_call.1} parent=1 // pred_check
      _
    $region19: #{tpu_custom_call.1} parent=1 // pred_check_branch
      %23 = sbr.rel (0) target = $region21
    $region20: #{tpu_custom_call.1} parent=1 // pred_region
      _
    $region21: #{tpu_custom_call.1} parent=1 // pred_fallthru
      _
    // Predicated region
    $region22: #{tpu_custom_call.1} parent=1 // pred_check
      _
    $region23: #{tpu_custom_call.1} parent=1 // pred_check_branch
      %25 = sbr.rel (0) target = $region25
    $region24: #{tpu_custom_call.1} parent=1 // pred_region
      _
    $region25: #{tpu_custom_call.1} parent=1 // pred_fallthru
      _
    %v26 = vld [vmem:[%s0] sm:$0xff]
    %v27 = vld [vmem:[%s0 + $0x8] sm:$0x3]
    %v28 = vlaneseq
    %v29 = vand.u32 %v28, 127
    %vm30 = vcmp.lt.s32.totalorder %v29, 0
    %v31 = vsub.s32 0, %v29
    %v32 = vsel %vm30, %v31, %v29
    %v33 = vmul.u32.u64.compose %v32, 2290649225
    %v34 = vextract.low.u32 %v33
    %v35 = vextract.high.u32 %v33
    %v36 = vshrl.u32 %v35, 5
    %v37 = vmul.u32 %v36, 60
    %v38 = vsub.s32 %v32, %v37
    %v39 = vsub.s32 0, %v38
    %v40 = vsel %vm30, %v39, %v38
    %vm41 = vcmp.ne.s32.totalorder %v40, 0
    %vm42 = vcmp.lt.s32.totalorder %v40, 0
    %vm43 = vmand %vm42, %vm41
    %v44 = vadd.s32 %v40, 60
    %v45 = vsel %vm43, %v44, %v40
    %vm46 = vcmp.eq.s32.totalorder %v45, 0
    %vm47 = vcmask 1048512
    %48 = vrot.lane.b32.xlu0 %v26, 120
    %v49 = vpop.permute.xlu0 %48
    %v50 = vsel %vm47, %v49, %v26
    %51 = vrot.lane.b32.xlu0 %v27, 120
    %v52 = vpop.permute.xlu0 %51
    %v53 = vsel %vm47, %v52, %v27
    %54 = vrot.lane.b32.xlu0 %v50, 120
    %v55 = vpop.permute.xlu0 %54
    %56 = vrot.lane.b32.xlu0 %v53, 120
    %v57 = vpop.permute.xlu0 %56
    %v58 = vsel %vm47, %v55, %v26
    %v59 = vsel %vm47, %v57, %v27
    %64 = vrot.lane.b32.xlu0 %v58, 9
    %v65 = vpop.permute.xlu0 %64
    %66 = vrot.lane.b32.xlu0 %v55, 9
    %v67 = vpop.permute.xlu0 %66
    %68 = vrot.lane.b32.xlu0 %v59, 9
    %v69 = vpop.permute.xlu0 %68
    %70 = vrot.lane.b32.xlu0 %v57, 9
    %v71 = vpop.permute.xlu0 %70
    %vm72 = vcmask 72704
    %v73 = vsel %vm72, %v65, %v67
    %v74 = vsel %vm72, %v69, %v71
    %v77 = vsel %vm46, 0.0, %v73
    %v78 = vsel %vm46, 0.0, %v74
    %vm79 = vcmp.eq.s32.totalorder %v45, 59
    %80 = vrot.lane.b32.xlu0 %v58, 127
    %v81 = vpop.permute.xlu0 %80
    %82 = vrot.lane.b32.xlu0 %v59, 127
    %v83 = vpop.permute.xlu0 %82
    %v86 = vsel %vm79, 0.0, %v81
    %v87 = vsel %vm79, 0.0, %v83
    %vm90 = vcmask 1041408
    %v91 = vrot.slane %v26, 6
    %v92 = vrot.slane %v27, 6
    %v93 = vsel %vm90, %v91, %v92
    %vm98 = vcmask 1043456
    %v99 = vrot.slane %v86, 4
    %v100 = vrot.slane %v87, 4
    %v101 = vsel %vm98, %v99, %v100
    %v103 = vsel %vm90, %v78, %v91
    %v104 = vsel %vm98, %v93, %v99
    %v105 = vld [vmem:[%s1] sm:$0xff]
    %v106 = vld [vmem:[%s1 + $0x8] sm:$0x3]
    %v107 = vld [vmem:[%s2] sm:$0xff]
    %v108 = vld [vmem:[%s2 + $0x8] sm:$0x3]
    %110 = vset.pattern.permute.xlu0 0
    %111 = vperm.xlu0 %110, %v107
    %v112 = vpop.permute.xlu0 %111
    %115 = vset.pattern.permute.xlu0 0
    %116 = vperm.xlu0 %115, %v108
    %v117 = vpop.permute.xlu0 %116
    %vm119 = vcmask 244736
    %v121 = vsel %vm119, %v105, 0
    %v124 = vsel %vm119, %v106, 0
    %vm126 = vcmask 1045504
    %v127 = vsel %vm126, %v101, 0
    %129 = vmatprep.subr.mxu0 0.0
    %130 = vmatpush1.msra.mxu0 %v77
    %131 = vmatprep.subr.mxu0 0.0
    %132 = vmatpush1.msra.mxu0 %v103
    %133 = vmatprep.subr.mxu0 0.0
    %134 = vmatpush1.msra.mxu0 %v104
    %135 = vmatprep.subr.mxu0 0.0
    %136 = vmatpush1.msra.mxu0 %v127
    %137 = vmatprep.subr.mxu0 0.0
    %138 = vmatpush1.msra.mxu0 0.0
    %139 = vmatprep.subr.mxu0 0.0
    %140 = vmatpush1.msra.mxu0 0.0
    %141 = vmatprep.subr.mxu0 0.0
    %142 = vmatpush1.msra.mxu0 0.0
    %143 = vmatprep.subr.mxu0 0.0
    %144 = vmatpush1.msra.mxu0 0.0
    %145 = vmatprep.subr.mxu0 0.0
    %146 = vmatpush1.msra.mxu0 0.0
    %147 = vmatprep.subr.mxu0 0.0
    %148 = vmatpush1.msra.mxu0 0.0
    %149 = vmatprep.subr.mxu0 0.0
    %150 = vmatpush1.msra.mxu0 0.0
    %151 = vmatprep.subr.mxu0 0.0
    %152 = vmatpush1.msra.mxu0 0.0
    %153 = vmatprep.subr.mxu0 0.0
    %154 = vmatpush1.msra.mxu0 0.0
    %155 = vmatprep.subr.mxu0 0.0
    %156 = vmatpush1.msra.mxu0 0.0
    %157 = vmatprep.subr.mxu0 0.0
    %158 = vmatpush1.msra.mxu0 0.0
    %159 = vmatprep.subr.mxu0 0.0
    %160 = vmatpush1.msra.mxu0 0.0
    %161 = vmatprep.subr.mxu0 0.0
    %162 = vmatpush1.msra.mxu0 0.0
    %163 = vmatprep.subr.mxu0 0.0
    %164 = vmatpush1.msra.mxu0 0.0
    %165 = vmatprep.subr.mxu0 0.0
    %166 = vmatpush1.msra.mxu0 0.0
    %167 = vmatprep.subr.mxu0 0.0
    %168 = vmatpush1.msra.mxu0 0.0
    %169 = vmatprep.subr.mxu0 0.0
    %170 = vmatpush1.msra.mxu0 0.0
    %171 = vmatprep.subr.mxu0 0.0
    %172 = vmatpush1.msra.mxu0 0.0
    %173 = vmatprep.subr.mxu0 0.0
    %174 = vmatpush1.msra.mxu0 0.0
    %175 = vmatprep.subr.mxu0 0.0
    %176 = vmatpush1.msra.mxu0 0.0
    %177 = vmatprep.subr.mxu0 0.0
    %178 = vmatpush1.msra.mxu0 0.0
    %179 = vmatprep.subr.mxu0 0.0
    %180 = vmatpush1.msra.mxu0 0.0
    %181 = vmatprep.subr.mxu0 0.0
    %182 = vmatpush1.msra.mxu0 0.0
    %183 = vmatprep.subr.mxu0 0.0
    %184 = vmatpush1.msra.mxu0 0.0
    %185 = vmatprep.subr.mxu0 0.0
    %186 = vmatpush1.msra.mxu0 0.0
    %187 = vmatprep.subr.mxu0 0.0
    %188 = vmatpush1.msra.mxu0 0.0
    %189 = vmatprep.subr.mxu0 0.0
    %190 = vmatpush1.msra.mxu0 0.0
    %191 = vmatprep.subr.mxu0 0.0
    %192 = vmatpush1.msra.mxu0 0.0
    %193 = vmatprep.mubr.f32.mxu0 0.0
    %194 = vmatmul.mubr.f32.gmra.mrb[0].mxu0 %v121
    %v195 = vpop.f32.mrb[0].mxu0
    %v196 = vadd.f32 %v112, %v195
    %v197 = vpop.f32.mrb[0].mxu0
    %198 = vmatprep.mubr.f32.mxu0 0.0
    %199 = vmatmul.mubr.f32.gmra.mrb[0].mxu0 %v124
    %v200 = vpop.f32.mrb[0].mxu0
    %v201 = vadd.f32 %v117, %v200
    %v202 = vpop.f32.mrb[0].mxu0
    %203 = vdwg.mxu0
    %v204 = vmax.f32 %v196, 0.0
    %v205 = vmax.f32 %v201, 0.0
    %v206 = vld [vmem:[%s3] sm:$0xff]
    %v207 = vld [vmem:[%s3 + $0x8] sm:$0x3]
    %v208 = vmul.f32 %v204, %v206
    %v209 = vmul.f32 %v205, %v207
    %v210 = vld [vmem:[%s4] sm:$0xff]
    %v211 = vld [vmem:[%s4 + $0x8] sm:$0xff]
    %v212 = vld [vmem:[%s4 + $0x10] sm:$0xff]
    %v213 = vld [vmem:[%s4 + $0x18] sm:$0xff]
    %v214 = vld [vmem:[%s4 + $0x20] sm:$0xff]
    %v215 = vld [vmem:[%s4 + $0x28] sm:$0xff]
    %v216 = vld [vmem:[%s4 + $0x30] sm:$0xff]
    %v217 = vld [vmem:[%s4 + $0x38] sm:$0xff]
    %v218 = vld [vmem:[%s4 + $0x40] sm:$0xff]
    %v219 = vld [vmem:[%s4 + $0x48] sm:$0xff]
    %v220 = vld [vmem:[%s4 + $0x50] sm:$0xff]
    %v221 = vld [vmem:[%s4 + $0x58] sm:$0xff]
    %v222 = vld [vmem:[%s4 + $0x60] sm:$0xff]
    %v223 = vld [vmem:[%s4 + $0x68] sm:$0xff]
    %v224 = vld [vmem:[%s4 + $0x70] sm:$0xff]
    %vm225 = vcmask 982016
    %v227 = vsel %vm225, %v208, 0
    %v230 = vsel %vm225, %v209, 0
    %232 = vmatprep.subr.mxu0 0.0
    %233 = vmatpush1.msra.mxu0 %v210
    %234 = vmatprep.subr.mxu0 0.0
    %235 = vmatpush1.msra.mxu0 %v211
    %236 = vmatprep.subr.mxu0 0.0
    %237 = vmatpush1.msra.mxu0 %v212
    %238 = vmatprep.subr.mxu0 0.0
    %239 = vmatpush1.msra.mxu0 %v213
    %240 = vmatprep.subr.mxu0 0.0
    %241 = vmatpush1.msra.mxu0 %v214
    %242 = vmatprep.subr.mxu0 0.0
    %243 = vmatpush1.msra.mxu0 %v215
    %244 = vmatprep.subr.mxu0 0.0
    %245 = vmatpush1.msra.mxu0 %v216
    %246 = vmatprep.subr.mxu0 0.0
    %247 = vmatpush1.msra.mxu0 %v217
    %248 = vmatprep.subr.mxu0 0.0
    %249 = vmatpush1.msra.mxu0 %v218
    %250 = vmatprep.subr.mxu0 0.0
    %251 = vmatpush1.msra.mxu0 %v219
    %252 = vmatprep.subr.mxu0 0.0
    %253 = vmatpush1.msra.mxu0 %v220
    %254 = vmatprep.subr.mxu0 0.0
    %255 = vmatpush1.msra.mxu0 %v221
    %256 = vmatprep.subr.mxu0 0.0
    %257 = vmatpush1.msra.mxu0 %v222
    %258 = vmatprep.subr.mxu0 0.0
    %259 = vmatpush1.msra.mxu0 %v223
    %260 = vmatprep.subr.mxu0 0.0
    %261 = vmatpush1.msra.mxu0 %v224
    %262 = vmatprep.subr.mxu0 0.0
    %263 = vmatpush1.msra.mxu0 0.0
    %264 = vmatprep.subr.mxu0 0.0
    %265 = vmatpush1.msra.mxu0 0.0
    %266 = vmatprep.subr.mxu0 0.0
    %267 = vmatpush1.msra.mxu0 0.0
    %268 = vmatprep.subr.mxu0 0.0
    %269 = vmatpush1.msra.mxu0 0.0
    %270 = vmatprep.subr.mxu0 0.0
    %271 = vmatpush1.msra.mxu0 0.0
    %272 = vmatprep.subr.mxu0 0.0
    %273 = vmatpush1.msra.mxu0 0.0
    %274 = vmatprep.subr.mxu0 0.0
    %275 = vmatpush1.msra.mxu0 0.0
    %276 = vmatprep.subr.mxu0 0.0
    %277 = vmatpush1.msra.mxu0 0.0
    %278 = vmatprep.subr.mxu0 0.0
    %279 = vmatpush1.msra.mxu0 0.0
    %280 = vmatprep.subr.mxu0 0.0
    %281 = vmatpush1.msra.mxu0 0.0
    %282 = vmatprep.subr.mxu0 0.0
    %283 = vmatpush1.msra.mxu0 0.0
    %284 = vmatprep.subr.mxu0 0.0
    %285 = vmatpush1.msra.mxu0 0.0
    %286 = vmatprep.subr.mxu0 0.0
    %287 = vmatpush1.msra.mxu0 0.0
    %288 = vmatprep.subr.mxu0 0.0
    %289 = vmatpush1.msra.mxu0 0.0
    %290 = vmatprep.subr.mxu0 0.0
    %291 = vmatpush1.msra.mxu0 0.0
    %292 = vmatprep.subr.mxu0 0.0
    %293 = vmatpush1.msra.mxu0 0.0
    %294 = vmatprep.subr.mxu0 0.0
    %295 = vmatpush1.msra.mxu0 0.0
    %296 = vmatprep.mubr.f32.mxu0 0.0
    %297 = vmatmul.mubr.f32.gmra.mrb[0].mxu0 %v227
    %v298 = vpop.f32.mrb[0].mxu0
    %v299 = vadd.f32 0.0, %v298
    %v300 = vpop.f32.mrb[0].mxu0
    %301 = vmatprep.mubr.f32.mxu0 0.0
    %302 = vmatmul.mubr.f32.gmra.mrb[0].mxu0 %v230
    %v303 = vpop.f32.mrb[0].mxu0
    %v304 = vadd.f32 0.0, %v303
    %v305 = vpop.f32.mrb[0].mxu0
    %306 = vdwg.mxu0
    %vm307 = vcmask 15360
    %v308 = vsel %vm307, %v299, 0.0
    %vm309 = vcmask 9216
    %v310 = vsel %vm309, %v304, 0.0
    %v311 = vadd.f32 %v308, %v310
    %v312 = vrot.slane %v311, 4
    %v313 = vadd.f32 %v311, %v312
    %v314 = vrot.slane %v313, 2
    %v315 = vadd.f32 %v313, %v314
    %v316 = vrot.slane %v315, 1
    %v317 = vadd.f32 %v315, %v316
    %v318 = vld [vmem:[#allocation2] sm:$0x1]
    %320 = vset.pattern.permute.xlu0 0
    %321 = vperm.xlu0 %320, %v318
    %v322 = vpop.permute.xlu0 %321
    %v324 = vlaneseq
    %v325 = vshrl.u32 %v324, 7
    %v326 = vsub.s32 0, %v325
    %v327 = vrot.slane %v322, %v326
    %v328 = vadd.f32 %v317, %v327
    %v329 = vxor.u32 %v328, 2147483648
    %v330 = vmul.f32 %v329, 1.442695
    %v331 = vpow.pop %v330
    %v332 = vadd.f32 %v331, 1.0
    %v333 = vrcp.pop %v332
    %v334 = vmul.f32 1.0, %v333
    %vm335 = vcmask 8192
    %336 = vst.msk [vmem:[#allocation3] sm:$0x1] %vm335, %v334
    // Predicated region
    $region26: #{tpu_custom_call.1} parent=1 // pred_check
      _
    $region27: #{tpu_custom_call.1} parent=1 // pred_check_branch
      %338 = sbr.rel (0) target = $region29
    $region28: #{tpu_custom_call.1} parent=1 // pred_region
      %s340 = ssub.s32 16, 16
      %341 = vsyncadd [#allocation4], %s340
      %s343 = sshll.u32 [#allocation3], 4
      %s344 = int_to_ptr.vmem [resolvable:$true] %s343
      %346 = dma.vmem_to_hbm [thread:$0]  %s344, 16, %s6, [#allocation4]
    $region29: #{tpu_custom_call.1} parent=1 // pred_fallthru
      _
    // Predicated region
    $region30: #{tpu_custom_call.1} parent=1 // pred_check
      _
    $region31: #{tpu_custom_call.1} parent=1 // pred_check_branch
      %348 = sbr.rel (0) target = $region33
    $region32: #{tpu_custom_call.1} parent=1 // pred_region
      %349 = dma.done [#allocation4], 16
    $region33: #{tpu_custom_call.1} parent=1 // pred_fallthru
      _
    %350 = vsyncpa [#allocation4], 1

</llo_original>
